<compile_context>
chip_gen: v5e
topology: v5e:2x2
jax: 0.10.0
libtpu: 0.0.40
codegen_flags: <defaults>
</compile_context>

<pallas_src>
import jax
import jax.numpy as jnp
from jax.experimental import pallas as pl
from jax.experimental.pallas import tpu as pltpu


def _round_up(n, m):
    return ((n + m - 1) // m) * m


def _choose_tm(M, tm_max):
    """Pick the M tile: multiple of 16 (bf16 sublane pack), ideally a multiple
    of 256 (MXU-shaped) that divides M exactly (no M pad, no edge block)."""
    tm_max = max(16, (tm_max // 16) * 16)
    if M <= tm_max:
        return _round_up(M, 16)
    t = (tm_max // 256) * 256
    while t >= 256:
        if M % t == 0:
            return t
        t -= 256
    return tm_max  # fall back: pad M up to a multiple of tm_max


def _patch_embed_kernel(x_ref, w_ref, b_ref, o_ref):
    # x_ref: (tm, K) bf16 patches (streamed); w_ref: (K, Ep) bf16 (resident);
    # b_ref: (1, Ep) f32 (resident); o_ref: (tm, Ep) out dtype.
    acc = jnp.dot(x_ref[...], w_ref[...], preferred_element_type=jnp.float32)
    o_ref[...] = (acc + b_ref[...]).astype(o_ref.dtype)


def patch_embed_forward(x, weight, bias, patch_size, *, tm=1024, out_dtype=None):
    """x: (B, C, H, W); weight: (E, C, p, p); bias: (E,) -> (B, N, E)."""
    B, C, H, W = x.shape
    E = weight.shape[0]
    p = patch_size
    assert H % p == 0 and W % p == 0, "H and W must be divisible by patch_size"
    Hp, Wp = H // p, W // p
    N = Hp * Wp
    K = C * p * p
    M = B * N
    out_dtype = x.dtype if out_dtype is None else out_dtype

    # Lane-dense embed dim so the output store is an unmasked vst (no-op at
    # production E=768).  K is intentionally left unpadded (full-dim block).
    Ep = _round_up(E, 128)
    tm = _choose_tm(M, tm)
    Mp = _round_up(M, tm)

    # im2col in (c, kh, kw) order (matches Conv2d reduction order) + bf16 cast.
    # With no K pad (and usually no M pad) this is reshape/transpose/cast only;
    # allow_input_fusion lets XLA feed it straight into operand 0 instead of
    # materializing the patch tensor through HBM.
    patches = (
        x.reshape(B, C, Hp, p, Wp, p)
        .transpose(0, 2, 4, 1, 3, 5)        # (B, Hp, Wp, C, p, p)
        .reshape(M, K)
        .astype(jnp.bfloat16)
    )
    if Mp != M:
        patches = jnp.pad(patches, ((0, Mp - M), (0, 0)))

    w2 = weight.reshape(E, K).T.astype(jnp.bfloat16)            # (K, E)
    if Ep != E:
        w2 = jnp.pad(w2, ((0, 0), (0, Ep - E)))                 # (K, Ep)
    b2 = bias.astype(jnp.float32).reshape(1, E)
    if Ep != E:
        b2 = jnp.pad(b2, ((0, 0), (0, Ep - E)))                 # (1, Ep)

    grid = (Mp // tm,)
    out = pl.pallas_call(
        _patch_embed_kernel,
        out_shape=jax.ShapeDtypeStruct((Mp, Ep), out_dtype),
        grid=grid,
        in_specs=[
            pl.BlockSpec((tm, K), lambda i: (i, 0)),    # streamed M tiles
            pl.BlockSpec((K, Ep), lambda i: (0, 0)),    # resident weight
            pl.BlockSpec((1, Ep), lambda i: (0, 0)),    # resident bias
        ],
        out_specs=pl.BlockSpec((tm, Ep), lambda i: (i, 0)),
        compiler_params=pltpu.CompilerParams(
            dimension_semantics=("parallel",),          # megacore split on v7x
            allow_input_fusion=[True, False, False],    # fuse im2col into operand 0
            vmem_limit_bytes=32 * 1024 * 1024,
        ),
    )(patches, w2, b2)

    if Mp != M or Ep != E:
        out = out[:M, :E]
    return out.reshape(B, N, E)


if __name__ == "__main__":
    # Small shapes consistent with the module: Conv2d(3, embed_dim, p, p),
    # img_size=16, patch_size=4, embed_dim=32, batch=2.
    B, C, H, W = 2, 3, 16, 16
    p = 4
    E = 32

    key = jax.random.PRNGKey(0)
    kx, kw, kb = jax.random.split(key, 3)
    x = jax.random.normal(kx, (B, C, H, W), dtype=jnp.float32)
    weight = jax.random.normal(kw, (E, C, p, p), dtype=jnp.float32) * 0.02
    bias = jax.random.normal(kb, (E,), dtype=jnp.float32) * 0.02

    out = patch_embed_forward(x, weight, bias, p)
    out = jax.block_until_ready(out)

    # Pure-JAX reference (same bf16 operand rounding as the kernel, f32 accum).
    Hp, Wp = H // p, W // p
    N = Hp * Wp
    K = C * p * p
    ref_patches = (
        x.reshape(B, C, Hp, p, Wp, p)
        .transpose(0, 2, 4, 1, 3, 5)
        .reshape(B, N, K)
        .astype(jnp.bfloat16)
        .astype(jnp.float32)
    )
    ref_w = weight.reshape(E, K).astype(jnp.bfloat16).astype(jnp.float32)
    ref = jnp.einsum("bnk,ek->bne", ref_patches, ref_w) + bias

    assert out.shape == (B, N, E)
    assert out.dtype == x.dtype
    assert jnp.allclose(out.astype(jnp.float32), ref, atol=2e-3, rtol=2e-3)

    print("KERNEL_OK")
</pallas_src>

<mosaic_0001>
module attributes {stable_mosaic.version = 11 : i64} {
  func.func @_patch_embed_kernel(%arg0: i32, %arg1: memref<32x48xbf16, #tpu.memory_space<vmem>>, %arg2: memref<48x128xbf16, #tpu.memory_space<vmem>>, %arg3: memref<1x128xf32, #tpu.memory_space<vmem>>, %arg4: memref<32x128xf32, #tpu.memory_space<vmem>>) attributes {dimension_semantics = [#tpu.dimension_semantics<parallel>], iteration_bounds = array<i64: 1>, scalar_prefetch = 0 : i64, scratch_operands = 0 : i64, tpu.core_type = #tpu.core_type<tc>, window_params = [{transform_indices = @transform_0, window_bounds = array<i64: 32, 48>}, {pipeline_mode = #tpu.pipeline_mode<synchronous>, transform_indices = @transform_1, window_bounds = array<i64: 48, 128>}, {pipeline_mode = #tpu.pipeline_mode<synchronous>, transform_indices = @transform_2, window_bounds = array<i64: 1, 128>}, {transform_indices = @transform_3, window_bounds = array<i64: 32, 128>}]} {
    %c0 = arith.constant 0 : index
    %c0_0 = arith.constant 0 : index
    %0 = vector.load %arg1[%c0, %c0_0] : memref<32x48xbf16, #tpu.memory_space<vmem>>, vector<32x48xbf16>
    %c0_1 = arith.constant 0 : index
    %c0_2 = arith.constant 0 : index
    %1 = vector.load %arg2[%c0_1, %c0_2] : memref<48x128xbf16, #tpu.memory_space<vmem>>, vector<48x128xbf16>
    %cst = arith.constant dense<0.000000e+00> : vector<32x128xf32>
    %2 = tpu.matmul %0, %1, %cst {dimension_numbers = #tpu.dot_dimension_numbers<[1], [0], [0], [1], [0, 0, 1, 1], [], []>} : vector<32x48xbf16>, vector<48x128xbf16>, vector<32x128xf32> -> vector<32x128xf32>
    %c0_3 = arith.constant 0 : index
    %c0_4 = arith.constant 0 : index
    %3 = vector.load %arg3[%c0_3, %c0_4] : memref<1x128xf32, #tpu.memory_space<vmem>>, vector<1x128xf32>
    %4 = vector.broadcast %3 : vector<1x128xf32> to vector<32x128xf32>
    %5 = arith.addf %2, %4 : vector<32x128xf32>
    %c0_5 = arith.constant 0 : index
    %c0_6 = arith.constant 0 : index
    %6 = vector.load %arg4[%c0_5, %c0_6] : memref<32x128xf32, #tpu.memory_space<vmem>>, vector<32x128xf32>
    tpu.vector_store %arg4[%c0_5, %c0_6], %5 {strides = array<i32>} : memref<32x128xf32, #tpu.memory_space<vmem>>, vector<32x128xf32>,
    return
  }
  func.func @transform_0(%arg0: i32) -> (i32, i32) {
    %c0_i32 = arith.constant 0 : i32
    %c0_i32_0 = arith.constant 0 : i32
    return %arg0, %c0_i32 : i32, i32
  }
  func.func @transform_1(%arg0: i32) -> (i32, i32) {
    %c0_i32 = arith.constant 0 : i32
    %c0_i32_0 = arith.constant 0 : i32
    %c0_i32_1 = arith.constant 0 : i32
    return %c0_i32, %c0_i32_0 : i32, i32
  }
  func.func @transform_2(%arg0: i32) -> (i32, i32) {
    %c0_i32 = arith.constant 0 : i32
    %c0_i32_0 = arith.constant 0 : i32
    %c0_i32_1 = arith.constant 0 : i32
    return %c0_i32, %c0_i32_0 : i32, i32
  }
  func.func @transform_3(%arg0: i32) -> (i32, i32) {
    %c0_i32 = arith.constant 0 : i32
    %c0_i32_0 = arith.constant 0 : i32
    return %arg0, %c0_i32 : i32, i32
  }
}

</mosaic_0001>

<llo_original>
// kernel: tpu_custom_call.1
$region0: #{tpu_custom_call.1}
  #allocation0 [shape = 'u32[]', space=smem, size = 0x4, offset = 0x4, fixed_abs, tag = 'smem constant byte address 0x4 - core index']
  #allocation1 [shape = 'u32[72,128]{1,0:T(1,128)}', space=vmem, size = 0x9000, scoped, tag = 'internal scratch']
  %s0 = inlined_call_operand.hbm [shape: bf16[32,48], index: 0, kind: input, shape index: {}]
  %s1 = inlined_call_operand.hbm [shape: bf16[48,128], index: 1, kind: input, shape index: {}]
  %s2 = inlined_call_operand.vmem [shape: f32[1,128], index: 2, kind: input, shape index: {}]
  %s3 = inlined_call_operand.hbm [shape: f32[32,128], index: 3, kind: output, shape index: {}]
  %s4 = sld [smem:[#allocation0]]
  $region30: #{tpu_custom_call.1} parent=0
    _
  %s6 = ssub.s32 1, %s4
  %s7 = scalar_select 0, %s6, %s4
  $region1: #{tpu_custom_call.1} parent=0
    #allocation2 [shape = 'u8[8192]{0}', space=vmem, size = 0x2000, scoped, tag = 'input window, operand 0, single buffered']
    #allocation3 [shape = 's32[1]{0}', space=sflag, size = 0x4, scoped, tag = 'scoped memory for tpu_custom_call.1']
    #allocation4 [shape = 's32[1]{0}', space=sflag, size = 0x4, scoped, tag = 'scoped memory for tpu_custom_call.1']
    #allocation5 [shape = 'u8[12288]{0}', space=vmem, size = 0x3000, scoped, tag = 'input window, operand 1, single buffered']
    #allocation6 [shape = 's32[1]{0}', space=sflag, size = 0x4, scoped, tag = 'scoped memory for tpu_custom_call.1']
    #allocation7 [shape = 'u8[16384]{0}', space=vmem, size = 0x4000, scoped, tag = 'output window, operand 0, single buffered']
    %8 = vsyncpa [#allocation3], 0
    %9 = vsyncpa [#allocation6], 0
    %10 = vsyncpa [#allocation4], 0
    // Predicated region
    $region2: #{tpu_custom_call.1} parent=1 // pred_check
      _
    $region3: #{tpu_custom_call.1} parent=1 // pred_check_branch
      %12 = sbr.rel (0) target = $region5
    $region4: #{tpu_custom_call.1} parent=1 // pred_region
      %14 = vsyncadd [#allocation3], 0
      %s15 = sshll.u32 %s0, 4
      %s16 = int_to_ptr.hbm [resolvable:$true] %s15
      %s17 = sshll.u32 [#allocation2], 4
      %s18 = int_to_ptr.vmem [resolvable:$true] %s17
      %23 = dma.hbm_to_vmem [thread:$0]  %s16, 256, %s18, [#allocation3], 64, 64, 4
    $region5: #{tpu_custom_call.1} parent=1 // pred_fallthru
      _
    // Predicated region
    $region6: #{tpu_custom_call.1} parent=1 // pred_check
      _
    $region7: #{tpu_custom_call.1} parent=1 // pred_check_branch
      %25 = sbr.rel (0) target = $region9
    $region8: #{tpu_custom_call.1} parent=1 // pred_region
      %27 = vsyncadd [#allocation6], 0
      %s28 = sshll.u32 %s1, 4
      %s29 = int_to_ptr.hbm [resolvable:$true] %s28
      %s30 = sshll.u32 [#allocation5], 4
      %s31 = int_to_ptr.vmem [resolvable:$true] %s30
      %36 = dma.hbm_to_vmem [thread:$0]  %s29, 384, %s31, [#allocation6], 64, 64, 4
    $region9: #{tpu_custom_call.1} parent=1 // pred_fallthru
      _
    // Predicated region
    $region10: #{tpu_custom_call.1} parent=1 // pred_check
      _
    $region11: #{tpu_custom_call.1} parent=1 // pred_check_branch
      %38 = sbr.rel (0) target = $region13
    $region12: #{tpu_custom_call.1} parent=1 // pred_region
      _
    $region13: #{tpu_custom_call.1} parent=1 // pred_fallthru
      _
    // Predicated region
    $region14: #{tpu_custom_call.1} parent=1 // pred_check
      _
    $region15: #{tpu_custom_call.1} parent=1 // pred_check_branch
      %40 = sbr.rel (0) target = $region17
    $region16: #{tpu_custom_call.1} parent=1 // pred_region
      %42 = dma.done [#allocation3], 256
    $region17: #{tpu_custom_call.1} parent=1 // pred_fallthru
      _
    // Predicated region
    $region18: #{tpu_custom_call.1} parent=1 // pred_check
      _
    $region19: #{tpu_custom_call.1} parent=1 // pred_check_branch
      %44 = sbr.rel (0) target = $region21
    $region20: #{tpu_custom_call.1} parent=1 // pred_region
      %46 = dma.done [#allocation6], 384
    $region21: #{tpu_custom_call.1} parent=1 // pred_fallthru
      _
    %v48 = vld [vmem:[#allocation2] sm:$0xf]
    %v49 = vld [vmem:[#allocation2 + $0x4] sm:$0xf]
    %v50 = vld [vmem:[#allocation2 + $0x8] sm:$0xf]
    %v51 = vld [vmem:[#allocation2 + $0xc] sm:$0xf]
    %v52 = vld [vmem:[#allocation5] sm:$0xf]
    %v53 = vld [vmem:[#allocation5 + $0x4] sm:$0xf]
    %v54 = vld [vmem:[#allocation5 + $0x8] sm:$0xf]
    %v55 = vld [vmem:[#allocation5 + $0xc] sm:$0xf]
    %v56 = vld [vmem:[#allocation5 + $0x10] sm:$0xf]
    %v57 = vld [vmem:[#allocation5 + $0x14] sm:$0xf]
    %v58 = vld [vmem:[%s2] sm:$0x1]
    %v60 = vperm.slane %v58, 0
    %v66 = vunpack.c.l.b16 %v48
    %v67 = vunpack.c.l.b16 %v49
    %v68 = vunpack.c.l.b16 %v50
    %v69 = vunpack.c.l.b16 %v51
    %v70 = vpack.c.b16 %v67, %v66
    %v71 = vpack.c.b16 %v69, %v68
    %v78 = vunpack.c.l.b16 %v52
    %v79 = vunpack.c.l.b16 %v53
    %v80 = vunpack.c.l.b16 %v54
    %v81 = vunpack.c.l.b16 %v55
    %v82 = vunpack.c.l.b16 %v56
    %v83 = vunpack.c.l.b16 %v57
    %v84 = vpack.c.b16 %v79, %v78
    %v85 = vpack.c.b16 %v81, %v80
    %v86 = vpack.c.b16 %v83, %v82
    %vm90 = vcmask 392192
    %v92 = vsel %vm90, %v70, 0
    %v95 = vsel %vm90, %v71, 0
    %97 = vmatpush.bf16.msra.mxu0 0
    %98 = vmatpush.bf16.msra.mxu0 0
    %99 = vmatpush.bf16.msra.mxu0 0
    %100 = vmatpush.bf16.msra.mxu0 0
    %101 = vmatpush.bf16.msra.mxu0 0
    %102 = vmatpush.bf16.msra.mxu0 %v86
    %103 = vmatpush.bf16.msra.mxu0 %v85
    %104 = vmatpush.bf16.msra.mxu0 %v84
    %105 = vmatmul.bf16.gmra.mxu0 %v92
    %v106 = vpop.f32.mrf.mxu0
    %v107 = vadd.f32 %v60, %v106
    %v108 = vpop.f32.mrf.mxu0
    %v109 = vadd.f32 %v60, %v108
    %110 = vmatmul.bf16.gmra.mxu0 %v95
    %v111 = vpop.f32.mrf.mxu0
    %v112 = vadd.f32 %v60, %v111
    %v113 = vpop.f32.mrf.mxu0
    %v114 = vadd.f32 %v60, %v113
    %115 = vdwg.mxu0
    %116 = vst [vmem:[#allocation7] sm:$0xff] %v107
    %117 = vst [vmem:[#allocation7 + $0x8] sm:$0xff] %v109
    %118 = vst [vmem:[#allocation7 + $0x10] sm:$0xff] %v112
    %119 = vst [vmem:[#allocation7 + $0x18] sm:$0xff] %v114
    // Predicated region
    $region22: #{tpu_custom_call.1} parent=1 // pred_check
      _
    $region23: #{tpu_custom_call.1} parent=1 // pred_check_branch
      %121 = sbr.rel (0) target = $region25
    $region24: #{tpu_custom_call.1} parent=1 // pred_region
      %123 = vsyncadd [#allocation4], 0
      %s124 = sshll.u32 [#allocation7], 4
      %s125 = int_to_ptr.vmem [resolvable:$true] %s124
      %s126 = sshll.u32 %s3, 4
      %s127 = int_to_ptr.hbm [resolvable:$true] %s126
      %132 = dma.vmem_to_hbm [thread:$0]  %s125, 512, %s127, [#allocation4], 128, 128, 8
    $region25: #{tpu_custom_call.1} parent=1 // pred_fallthru
      _
    // Predicated region
    $region26: #{tpu_custom_call.1} parent=1 // pred_check
      _
    $region27: #{tpu_custom_call.1} parent=1 // pred_check_branch
      %134 = sbr.rel (0) target = $region29
    $region28: #{tpu_custom_call.1} parent=1 // pred_region
      %136 = dma.done [#allocation4], 512
    $region29: #{tpu_custom_call.1} parent=1 // pred_fallthru
      _
    %137 = vsyncpa [#allocation3], 1
    %138 = vsyncpa [#allocation6], 1
    %139 = vsyncpa [#allocation4], 1

</llo_original>
